<compile_context>
chip_gen: v7x
topology: tpu7x:2x2x1
jax: 0.10.0
libtpu: 0.0.40
codegen_flags: <defaults>
</compile_context>

<pallas_src>
import functools
import math

import jax
import jax.numpy as jnp
from jax.experimental import pallas as pl
from jax.experimental.pallas import tpu as pltpu


def temporal_embedding_kernel(idx_ref, table_ref, bias_ref, out_ref, *, n_cols):
    """One grid step: TM output tokens.

    idx_ref:   (TM, n_cols) int32 -- indices into the premultiplied table; column
                                     c = k*n_feat + f already carries the feature
                                     offset AND the per-tap offset k*Vtot.
    table_ref: (Kpad, D) bf16     -- conv-weight-premultiplied, concatenated tables.
    bias_ref:  (1, D) f32
    out_ref:   (TM, D) f32
    """
    tm = out_ref.shape[0]
    kdim = table_ref.shape[0]

    idx = idx_ref[...]                                               # (TM, n_cols) int32
    lane_iota = jax.lax.broadcasted_iota(jnp.int32, (tm, kdim), 1)

    # Disjoint-range multi-hot: OR of per-column one-hots, single cast at the end.
    hit = idx[:, 0:1] == lane_iota
    for c in range(1, n_cols):                                       # static unroll (small)
        hit = hit | (idx[:, c:c + 1] == lane_iota)
    multi_hot = hit.astype(jnp.float32).astype(jnp.bfloat16)         # one-hot exact in bf16

    # Single MXU matmul does: embedding gather + 4-way feature sum + all Conv1d taps.
    acc = jnp.dot(multi_hot, table_ref[...], preferred_element_type=jnp.float32)
    out_ref[...] = (acc + bias_ref[...]).astype(out_ref.dtype)


def temporal_embedding(x, weekday_table, month_table, day_table, quarter_table,
                       conv_weight, conv_bias, t_patch_size, tm=1024):
    """Pallas implementation of TemporalEmbedding.forward.

    x:            (B, S, F) int  -- column 0 -> weekday, 1 -> month, 2 -> day, 4 -> quarter
                                    (exactly as indexed by the PyTorch module)
    *_table:      (vocab, d_model) f32 embedding tables
    conv_weight:  (d_model, d_model, t_patch_size)  (PyTorch Conv1d layout: out, in, k)
    conv_bias:    (d_model,)
    returns:      (B, S // t_patch_size, d_model) f32
    """
    B, S, _ = x.shape
    t = t_patch_size
    assert S % t == 0, "seq_len must be divisible by t_patch_size"
    O = S // t
    M = B * O
    D = conv_weight.shape[0]
    n_feat = 4
    n_cols = t * n_feat

    # ---- fold the Conv1d weight into the concatenated embedding table (once, in JAX) ----
    tables = [weekday_table, month_table, day_table, quarter_table]
    offsets, off = [], 0
    for tab in tables:
        offsets.append(off)
        off += tab.shape[0]
    v_tot = off
    table_cat = jnp.concatenate(tables, axis=0).astype(jnp.float32)       # (Vtot, D)

    w_t = jnp.transpose(conv_weight, (2, 1, 0)).astype(jnp.float32)       # (t, D_in, D_out)
    premul = jnp.einsum("vd,tde->tve", table_cat, w_t).reshape(t * v_tot, D)
    k_pad = ((t * v_tot + 127) // 128) * 128                              # lane-align MXU K
    premul = jnp.pad(premul, ((0, k_pad - t * v_tot), (0, 0))).astype(jnp.bfloat16)

    # ---- indices: feature offset + per-tap offset k*Vtot, one column per (tap, feature) ----
    feat_cols = (0, 1, 2, 4)                                              # module's indexing
    idx = jnp.stack(
        [x[:, :, c].astype(jnp.int32) + jnp.int32(o) for c, o in zip(feat_cols, offsets)],
        axis=-1)                                                          # (B, S, 4)
    idx = idx.reshape(B, O, t, n_feat)
    idx = idx + (jnp.arange(t, dtype=jnp.int32) * v_tot)[None, None, :, None]
    idx = idx.reshape(M, n_cols)                                          # col = k*4 + f

    b_2d = conv_bias.reshape(1, D).astype(jnp.float32)

    # Row tile: large (default 1024), multiple of 8, clamped to problem size.
    tm_eff = max(8, min(tm, ((M + 7) // 8) * 8))
    tm_eff = (tm_eff // 8) * 8
    Mp = ((M + tm_eff - 1) // tm_eff) * tm_eff
    if Mp != M:
        idx = jnp.pad(idx, ((0, Mp - M), (0, 0)))                         # padded rows discarded

    flops = 2 * Mp * k_pad * D
    bytes_accessed = 4 * Mp * n_cols + 2 * k_pad * D + 4 * D + 4 * Mp * D

    out = pl.pallas_call(
        functools.partial(temporal_embedding_kernel, n_cols=n_cols),
        out_shape=jax.ShapeDtypeStruct((Mp, D), jnp.float32),
        grid_spec=pltpu.PrefetchScalarGridSpec(
            num_scalar_prefetch=0,
            grid=(Mp // tm_eff,),
            in_specs=[
                pl.BlockSpec((tm_eff, n_cols), lambda i: (i, 0)),         # indices (streamed)
                pl.BlockSpec((k_pad, D), lambda i: (0, 0)),               # premul table (resident)
                pl.BlockSpec((1, D), lambda i: (0, 0)),                   # bias (resident)
            ],
            out_specs=pl.BlockSpec((tm_eff, D), lambda i: (i, 0)),
        ),
        compiler_params=pltpu.CompilerParams(
            dimension_semantics=("parallel",)),                           # 2-TC sharding on v7x
        cost_estimate=pl.CostEstimate(flops=int(flops), transcendentals=0,
                                      bytes_accessed=int(bytes_accessed)),
    )(idx, premul, b_2d)

    return out[:M].reshape(B, O, D)


if __name__ == "__main__":
    key = jax.random.PRNGKey(0)
    d_model = 32
    t_patch_size = 2
    weekday_size, month_size, day_size, quarter_size, hour_size = 7, 12, 31, 4, 48
    B, S, F = 2, 12, 6                       # M = B * S/t = 12 output tokens

    ks = jax.random.split(key, 12)

    # Parameter init mirroring the PyTorch defaults (N(0,1) embeddings, uniform conv).
    wk_tab = jax.random.normal(ks[0], (weekday_size, d_model), jnp.float32)
    mo_tab = jax.random.normal(ks[1], (month_size, d_model), jnp.float32)
    dy_tab = jax.random.normal(ks[2], (day_size, d_model), jnp.float32)
    qt_tab = jax.random.normal(ks[3], (quarter_size, d_model), jnp.float32)
    fan_in = d_model * t_patch_size
    bound = 1.0 / math.sqrt(fan_in)
    conv_w = jax.random.uniform(ks[4], (d_model, d_model, t_patch_size), jnp.float32,
                                -bound, bound)
    conv_b = jax.random.uniform(ks[5], (d_model,), jnp.float32, -bound, bound)

    # Calendar-mark input (B, S, 6). Module uses cols 0 (weekday), 1 (month),
    # 2 (day), 4 (quarter); cols 3 and 5 are unused by forward().
    x = jnp.stack([
        jax.random.randint(ks[6], (B, S), 0, weekday_size),
        jax.random.randint(ks[7], (B, S), 0, month_size),
        jax.random.randint(ks[8], (B, S), 0, day_size),
        jax.random.randint(ks[9], (B, S), 0, hour_size),
        jax.random.randint(ks[10], (B, S), 0, quarter_size),
        jax.random.randint(ks[11], (B, S), 0, 10),
    ], axis=-1).astype(jnp.int32)

    # Run the Pallas kernel: default (large) tile, and a small tile to exercise a
    # multi-step grid + row padding.
    out_big = temporal_embedding(x, wk_tab, mo_tab, dy_tab, qt_tab,
                                 conv_w, conv_b, t_patch_size)
    out_small = temporal_embedding(x, wk_tab, mo_tab, dy_tab, qt_tab,
                                   conv_w, conv_b, t_patch_size, tm=8)
    jax.block_until_ready((out_big, out_small))

    # Pure-JAX f32 reference: gather + sum + strided Conv1d (as a per-patch einsum).
    emb = (wk_tab[x[:, :, 0]] + mo_tab[x[:, :, 1]]
           + dy_tab[x[:, :, 2]] + qt_tab[x[:, :, 4]])                    # (B, S, D)
    er = emb.reshape(B, S // t_patch_size, t_patch_size, d_model)
    ref = jnp.einsum("bskc,dck->bsd", er, conv_w) + conv_b               # (B, S/t, D)

    # Tolerance relaxed vs. the pure-f32 reference: the premultiplied table is fed to
    # the MXU in bf16 (one-hot mask is exact; f32 accumulation retained).
    assert out_big.shape == (B, S // t_patch_size, d_model), "shape mismatch"
    assert jnp.allclose(out_big, ref, atol=3e-2, rtol=3e-2), "token mismatch (tm=default)"
    assert jnp.allclose(out_small, ref, atol=3e-2, rtol=3e-2), "token mismatch (tm=8)"

    print("KERNEL_OK")
</pallas_src>

<mosaic_0001>
module attributes {stable_mosaic.version = 11 : i64} {
  func.func @temporal_embedding_kernel(%arg0: i32, %arg1: memref<16x8xi32, #tpu.memory_space<vmem>>, %arg2: memref<128x32xbf16, #tpu.memory_space<vmem>>, %arg3: memref<1x32xf32, #tpu.memory_space<vmem>>, %arg4: memref<16x32xf32, #tpu.memory_space<vmem>>) attributes {dimension_semantics = [#tpu.dimension_semantics<parallel>], iteration_bounds = array<i64: 1>, scalar_prefetch = 0 : i64, scratch_operands = 0 : i64, tpu.core_type = #tpu.core_type<tc>, window_params = [{transform_indices = @transform_0, window_bounds = array<i64: 16, 8>}, {pipeline_mode = #tpu.pipeline_mode<synchronous>, transform_indices = @transform_1, window_bounds = array<i64: 128, 32>}, {pipeline_mode = #tpu.pipeline_mode<synchronous>, transform_indices = @transform_2, window_bounds = array<i64: 1, 32>}, {transform_indices = @transform_3, window_bounds = array<i64: 16, 32>}]} {
    %c0 = arith.constant 0 : index
    %c0_0 = arith.constant 0 : index
    %0 = vector.load %arg1[%c0, %c0_0] : memref<16x8xi32, #tpu.memory_space<vmem>>, vector<16x8xi32>
    %1 = tpu.iota {dimensions = array<i32: 1>} : vector<16x128xi32>
    %2 = vector.extract_strided_slice %0 {offsets = [0, 0], sizes = [16, 1], strides = [1, 1]} : vector<16x8xi32> to vector<16x1xi32>
    %3 = vector.broadcast %2 : vector<16x1xi32> to vector<16x128xi32>
    %4 = arith.cmpi eq, %3, %1 : vector<16x128xi32>
    %5 = vector.extract_strided_slice %0 {offsets = [0, 1], sizes = [16, 1], strides = [1, 1]} : vector<16x8xi32> to vector<16x1xi32>
    %6 = vector.broadcast %5 : vector<16x1xi32> to vector<16x128xi32>
    %7 = arith.cmpi eq, %6, %1 : vector<16x128xi32>
    %8 = arith.ori %4, %7 : vector<16x128xi1>
    %9 = vector.extract_strided_slice %0 {offsets = [0, 2], sizes = [16, 1], strides = [1, 1]} : vector<16x8xi32> to vector<16x1xi32>
    %10 = vector.broadcast %9 : vector<16x1xi32> to vector<16x128xi32>
    %11 = arith.cmpi eq, %10, %1 : vector<16x128xi32>
    %12 = arith.ori %8, %11 : vector<16x128xi1>
    %13 = vector.extract_strided_slice %0 {offsets = [0, 3], sizes = [16, 1], strides = [1, 1]} : vector<16x8xi32> to vector<16x1xi32>
    %14 = vector.broadcast %13 : vector<16x1xi32> to vector<16x128xi32>
    %15 = arith.cmpi eq, %14, %1 : vector<16x128xi32>
    %16 = arith.ori %12, %15 : vector<16x128xi1>
    %17 = vector.extract_strided_slice %0 {offsets = [0, 4], sizes = [16, 1], strides = [1, 1]} : vector<16x8xi32> to vector<16x1xi32>
    %18 = vector.broadcast %17 : vector<16x1xi32> to vector<16x128xi32>
    %19 = arith.cmpi eq, %18, %1 : vector<16x128xi32>
    %20 = arith.ori %16, %19 : vector<16x128xi1>
    %21 = vector.extract_strided_slice %0 {offsets = [0, 5], sizes = [16, 1], strides = [1, 1]} : vector<16x8xi32> to vector<16x1xi32>
    %22 = vector.broadcast %21 : vector<16x1xi32> to vector<16x128xi32>
    %23 = arith.cmpi eq, %22, %1 : vector<16x128xi32>
    %24 = arith.ori %20, %23 : vector<16x128xi1>
    %25 = vector.extract_strided_slice %0 {offsets = [0, 6], sizes = [16, 1], strides = [1, 1]} : vector<16x8xi32> to vector<16x1xi32>
    %26 = vector.broadcast %25 : vector<16x1xi32> to vector<16x128xi32>
    %27 = arith.cmpi eq, %26, %1 : vector<16x128xi32>
    %28 = arith.ori %24, %27 : vector<16x128xi1>
    %29 = vector.extract_strided_slice %0 {offsets = [0, 7], sizes = [16, 1], strides = [1, 1]} : vector<16x8xi32> to vector<16x1xi32>
    %30 = vector.broadcast %29 : vector<16x1xi32> to vector<16x128xi32>
    %31 = arith.cmpi eq, %30, %1 : vector<16x128xi32>
    %32 = arith.ori %28, %31 : vector<16x128xi1>
    %33 = arith.extui %32 : vector<16x128xi1> to vector<16x128xi32>
    %34 = arith.sitofp %33 : vector<16x128xi32> to vector<16x128xf32>
    %35 = arith.truncf %34 : vector<16x128xf32> to vector<16x128xbf16>
    %c0_1 = arith.constant 0 : index
    %c0_2 = arith.constant 0 : index
    %36 = vector.load %arg2[%c0_1, %c0_2] : memref<128x32xbf16, #tpu.memory_space<vmem>>, vector<128x32xbf16>
    %cst = arith.constant dense<0.000000e+00> : vector<16x32xf32>
    %37 = tpu.matmul %35, %36, %cst {dimension_numbers = #tpu.dot_dimension_numbers<[1], [0], [0], [1], [0, 0, 1, 1], [], []>} : vector<16x128xbf16>, vector<128x32xbf16>, vector<16x32xf32> -> vector<16x32xf32>
    %c0_3 = arith.constant 0 : index
    %c0_4 = arith.constant 0 : index
    %38 = vector.load %arg3[%c0_3, %c0_4] : memref<1x32xf32, #tpu.memory_space<vmem>>, vector<1x32xf32>
    %39 = vector.broadcast %38 : vector<1x32xf32> to vector<16x32xf32>
    %40 = arith.addf %37, %39 : vector<16x32xf32>
    %c0_5 = arith.constant 0 : index
    %c0_6 = arith.constant 0 : index
    %41 = vector.load %arg4[%c0_5, %c0_6] : memref<16x32xf32, #tpu.memory_space<vmem>>, vector<16x32xf32>
    tpu.vector_store %arg4[%c0_5, %c0_6], %40 {strides = array<i32>} : memref<16x32xf32, #tpu.memory_space<vmem>>, vector<16x32xf32>,
    return
  }
  func.func @transform_0(%arg0: i32) -> (i32, i32) {
    %c0_i32 = arith.constant 0 : i32
    %c0_i32_0 = arith.constant 0 : i32
    return %arg0, %c0_i32 : i32, i32
  }
  func.func @transform_1(%arg0: i32) -> (i32, i32) {
    %c0_i32 = arith.constant 0 : i32
    %c0_i32_0 = arith.constant 0 : i32
    %c0_i32_1 = arith.constant 0 : i32
    return %c0_i32, %c0_i32_0 : i32, i32
  }
  func.func @transform_2(%arg0: i32) -> (i32, i32) {
    %c0_i32 = arith.constant 0 : i32
    %c0_i32_0 = arith.constant 0 : i32
    %c0_i32_1 = arith.constant 0 : i32
    return %c0_i32, %c0_i32_0 : i32, i32
  }
  func.func @transform_3(%arg0: i32) -> (i32, i32) {
    %c0_i32 = arith.constant 0 : i32
    %c0_i32_0 = arith.constant 0 : i32
    return %arg0, %c0_i32 : i32, i32
  }
}

</mosaic_0001>

<llo_original>
// kernel: tpu_custom_call.1
$region0: #{tpu_custom_call.1}
  #allocation0 [shape = 'u32[]', space=smem, size = 0x4, offset = 0x4, fixed_abs, tag = 'smem constant byte address 0x4 - core index']
  #allocation1 [shape = 'u32[144,128]{1,0:T(1,128)}', space=vmem, size = 0x12000, scoped, tag = 'internal scratch']
  %s0 = inlined_call_operand.vmem [shape: s32[16,8], index: 0, kind: input, shape index: {}]
  %s1 = inlined_call_operand.vmem [shape: bf16[128,32], index: 1, kind: input, shape index: {}]
  %s2 = inlined_call_operand.vmem [shape: f32[1,32], index: 2, kind: input, shape index: {}]
  %s3 = inlined_call_operand.hbm [shape: f32[16,32], index: 3, kind: output, shape index: {}]
  %s4 = sld [smem:[#allocation0]]
  $region22: #{tpu_custom_call.1} parent=0
    _
  %s6 = ssub.s32 1, %s4
  %s7 = scalar_select 0, %s6, %s4
  $region1: #{tpu_custom_call.1} parent=0
    #allocation2 [shape = 'u8[8192]{0}', space=vmem, size = 0x2000, scoped, tag = 'output window, operand 0, single buffered']
    #allocation3 [shape = 's32[1]{0}', space=sflag, size = 0x4, scoped, tag = 'scoped memory for tpu_custom_call.1']
    %8 = vsyncpa [#allocation3], 0
    // Predicated region
    $region2: #{tpu_custom_call.1} parent=1 // pred_check
      _
    $region3: #{tpu_custom_call.1} parent=1 // pred_check_branch
      %10 = sbr.rel (0) target = $region5
    $region4: #{tpu_custom_call.1} parent=1 // pred_region
      _
    $region5: #{tpu_custom_call.1} parent=1 // pred_fallthru
      _
    // Predicated region
    $region6: #{tpu_custom_call.1} parent=1 // pred_check
      _
    $region7: #{tpu_custom_call.1} parent=1 // pred_check_branch
      %12 = sbr.rel (0) target = $region9
    $region8: #{tpu_custom_call.1} parent=1 // pred_region
      _
    $region9: #{tpu_custom_call.1} parent=1 // pred_fallthru
      _
    // Predicated region
    $region10: #{tpu_custom_call.1} parent=1 // pred_check
      _
    $region11: #{tpu_custom_call.1} parent=1 // pred_check_branch
      %14 = sbr.rel (0) target = $region13
    $region12: #{tpu_custom_call.1} parent=1 // pred_region
      _
    $region13: #{tpu_custom_call.1} parent=1 // pred_fallthru
      _
    %v16 = vld [vmem:[%s0] sm:$0xff]
    %v17 = vld [vmem:[%s0 + $0x8] sm:$0xff]
    %v18 = vlaneseq
    %v19 = vand.u32 %v18, 127
    %20 = vset.pattern.permute.xlu0 0
    %21 = vperm.xlu0 %20, %v16
    %v22 = vpop.permute.xlu0 %21
    %23 = vset.pattern.permute.xlu0 0
    %24 = vperm.xlu0 %23, %v17
    %v25 = vpop.permute.xlu0 %24
    %vm26 = vcmp.eq.s32.totalorder %v22, %v19
    %vm27 = vcmp.eq.s32.totalorder %v25, %v19
    %28 = vset.pattern.permute.xlu0 1
    %29 = vperm.xlu0 %28, %v16
    %v30 = vpop.permute.xlu0 %29
    %31 = vset.pattern.permute.xlu0 1
    %32 = vperm.xlu0 %31, %v17
    %v33 = vpop.permute.xlu0 %32
    %vm34 = vcmp.eq.s32.totalorder %v30, %v19
    %vm35 = vcmp.eq.s32.totalorder %v33, %v19
    %vm36 = vmor %vm26, %vm34
    %vm37 = vmor %vm27, %vm35
    %38 = vset.pattern.permute.xlu0 2
    %39 = vperm.xlu0 %38, %v16
    %v40 = vpop.permute.xlu0 %39
    %41 = vset.pattern.permute.xlu0 2
    %42 = vperm.xlu0 %41, %v17
    %v43 = vpop.permute.xlu0 %42
    %vm44 = vcmp.eq.s32.totalorder %v40, %v19
    %vm45 = vcmp.eq.s32.totalorder %v43, %v19
    %vm46 = vmor %vm36, %vm44
    %vm47 = vmor %vm37, %vm45
    %48 = vset.pattern.permute.xlu0 3
    %49 = vperm.xlu0 %48, %v16
    %v50 = vpop.permute.xlu0 %49
    %51 = vset.pattern.permute.xlu0 3
    %52 = vperm.xlu0 %51, %v17
    %v53 = vpop.permute.xlu0 %52
    %vm54 = vcmp.eq.s32.totalorder %v50, %v19
    %vm55 = vcmp.eq.s32.totalorder %v53, %v19
    %vm56 = vmor %vm46, %vm54
    %vm57 = vmor %vm47, %vm55
    %58 = vset.pattern.permute.xlu0 4
    %59 = vperm.xlu0 %58, %v16
    %v60 = vpop.permute.xlu0 %59
    %61 = vset.pattern.permute.xlu0 4
    %62 = vperm.xlu0 %61, %v17
    %v63 = vpop.permute.xlu0 %62
    %vm64 = vcmp.eq.s32.totalorder %v60, %v19
    %vm65 = vcmp.eq.s32.totalorder %v63, %v19
    %vm66 = vmor %vm56, %vm64
    %vm67 = vmor %vm57, %vm65
    %68 = vset.pattern.permute.xlu0 5
    %69 = vperm.xlu0 %68, %v16
    %v70 = vpop.permute.xlu0 %69
    %71 = vset.pattern.permute.xlu0 5
    %72 = vperm.xlu0 %71, %v17
    %v73 = vpop.permute.xlu0 %72
    %vm74 = vcmp.eq.s32.totalorder %v70, %v19
    %vm75 = vcmp.eq.s32.totalorder %v73, %v19
    %vm76 = vmor %vm66, %vm74
    %vm77 = vmor %vm67, %vm75
    %78 = vset.pattern.permute.xlu0 6
    %79 = vperm.xlu0 %78, %v16
    %v80 = vpop.permute.xlu0 %79
    %81 = vset.pattern.permute.xlu0 6
    %82 = vperm.xlu0 %81, %v17
    %v83 = vpop.permute.xlu0 %82
    %vm84 = vcmp.eq.s32.totalorder %v80, %v19
    %vm85 = vcmp.eq.s32.totalorder %v83, %v19
    %vm86 = vmor %vm76, %vm84
    %vm87 = vmor %vm77, %vm85
    %88 = vset.pattern.permute.xlu0 7
    %89 = vperm.xlu0 %88, %v16
    %v90 = vpop.permute.xlu0 %89
    %91 = vset.pattern.permute.xlu0 7
    %92 = vperm.xlu0 %91, %v17
    %v93 = vpop.permute.xlu0 %92
    %vm94 = vcmp.eq.s32.totalorder %v90, %v19
    %vm95 = vcmp.eq.s32.totalorder %v93, %v19
    %vm96 = vmor %vm86, %vm94
    %vm97 = vmor %vm87, %vm95
    %v98 = vsel %vm96, 1, 0
    %v99 = vsel %vm97, 1, 0
    %v100 = vcvt.s32.f32 %v98
    %v101 = vcvt.s32.f32 %v99
    %v102 = vpack.c.bf16 %v101, %v100
    %v103 = vld [vmem:[%s1] sm:$0xf]
    %v104 = vld [vmem:[%s1 + $0x4] sm:$0xf]
    %v105 = vld [vmem:[%s1 + $0x8] sm:$0xf]
    %v106 = vld [vmem:[%s1 + $0xc] sm:$0xf]
    %v107 = vld [vmem:[%s1 + $0x10] sm:$0xf]
    %v108 = vld [vmem:[%s1 + $0x14] sm:$0xf]
    %v109 = vld [vmem:[%s1 + $0x18] sm:$0xf]
    %v110 = vld [vmem:[%s1 + $0x1c] sm:$0xf]
    %v111 = vld [vmem:[%s1 + $0x20] sm:$0xf]
    %v112 = vld [vmem:[%s1 + $0x24] sm:$0xf]
    %v113 = vld [vmem:[%s1 + $0x28] sm:$0xf]
    %v114 = vld [vmem:[%s1 + $0x2c] sm:$0xf]
    %v115 = vld [vmem:[%s1 + $0x30] sm:$0xf]
    %v116 = vld [vmem:[%s1 + $0x34] sm:$0xf]
    %v117 = vld [vmem:[%s1 + $0x38] sm:$0xf]
    %v118 = vld [vmem:[%s1 + $0x3c] sm:$0xf]
    %v119 = vld [vmem:[%s2] sm:$0x1]
    %v121 = vlaneseq
    %v122 = vshrl.u32 %v121, 7
    %v123 = vsub.s32 0, %v122
    %v124 = vrot.slane %v119, %v123
    %v142 = vunpack.c.l.b16 %v103
    %v143 = vunpack.c.l.b16 %v104
    %v144 = vunpack.c.l.b16 %v105
    %v145 = vunpack.c.l.b16 %v106
    %v146 = vunpack.c.l.b16 %v107
    %v147 = vunpack.c.l.b16 %v108
    %v148 = vunpack.c.l.b16 %v109
    %v149 = vunpack.c.l.b16 %v110
    %v150 = vunpack.c.l.b16 %v111
    %v151 = vunpack.c.l.b16 %v112
    %v152 = vunpack.c.l.b16 %v113
    %v153 = vunpack.c.l.b16 %v114
    %v154 = vunpack.c.l.b16 %v115
    %v155 = vunpack.c.l.b16 %v116
    %v156 = vunpack.c.l.b16 %v117
    %v157 = vunpack.c.l.b16 %v118
    %v158 = vpack.c.b16 %v143, %v142
    %v159 = vpack.c.b16 %v145, %v144
    %v160 = vpack.c.b16 %v147, %v146
    %v161 = vpack.c.b16 %v149, %v148
    %v162 = vpack.c.b16 %v151, %v150
    %v163 = vpack.c.b16 %v153, %v152
    %v164 = vpack.c.b16 %v155, %v154
    %v165 = vpack.c.b16 %v157, %v156
    %174 = vmatprep.subr.bf16.mxu0 0
    %175 = vmatpush1.bf16.msra.mxu0 %v158
    %176 = vmatprep.subr.bf16.mxu0 0
    %177 = vmatpush1.bf16.msra.mxu0 %v159
    %178 = vmatprep.subr.bf16.mxu0 0
    %179 = vmatpush1.bf16.msra.mxu0 %v160
    %180 = vmatprep.subr.bf16.mxu0 0
    %181 = vmatpush1.bf16.msra.mxu0 %v161
    %182 = vmatprep.subr.bf16.mxu0 0
    %183 = vmatpush1.bf16.msra.mxu0 %v162
    %184 = vmatprep.subr.bf16.mxu0 0
    %185 = vmatpush1.bf16.msra.mxu0 %v163
    %186 = vmatprep.subr.bf16.mxu0 0
    %187 = vmatpush1.bf16.msra.mxu0 %v164
    %188 = vmatprep.subr.bf16.mxu0 0
    %189 = vmatpush1.bf16.msra.mxu0 %v165
    %190 = vmatprep.subr.bf16.mxu0 0
    %191 = vmatpush1.bf16.msra.mxu0 0
    %192 = vmatprep.subr.bf16.mxu0 0
    %193 = vmatpush1.bf16.msra.mxu0 0
    %194 = vmatprep.subr.bf16.mxu0 0
    %195 = vmatpush1.bf16.msra.mxu0 0
    %196 = vmatprep.subr.bf16.mxu0 0
    %197 = vmatpush1.bf16.msra.mxu0 0
    %198 = vmatprep.subr.bf16.mxu0 0
    %199 = vmatpush1.bf16.msra.mxu0 0
    %200 = vmatprep.subr.bf16.mxu0 0
    %201 = vmatpush1.bf16.msra.mxu0 0
    %202 = vmatprep.subr.bf16.mxu0 0
    %203 = vmatpush1.bf16.msra.mxu0 0
    %204 = vmatprep.subr.bf16.mxu0 0
    %205 = vmatpush1.bf16.msra.mxu0 0
    %206 = vmatprep.mubr.bf16.mxu0 0
    %207 = vmatmul.mubr.bf16.gmra.mrb[0].mxu0 %v102
    %v208 = vpop.f32.mrb[0].mxu0
    %v209 = vadd.f32 %v124, %v208
    %v210 = vpop.f32.mrb[0].mxu0
    %v211 = vpop.f32.mrb[0].mxu0
    %v212 = vadd.f32 %v124, %v211
    %v213 = vpop.f32.mrb[0].mxu0
    %214 = vdwg.mxu0
    %vm215 = vcmask 261120
    %216 = vst.msk [vmem:[#allocation2] sm:$0xff] %vm215, %v209
    %217 = vst.msk [vmem:[#allocation2 + $0x8] sm:$0xff] %vm215, %v212
    // Predicated region
    $region14: #{tpu_custom_call.1} parent=1 // pred_check
      _
    $region15: #{tpu_custom_call.1} parent=1 // pred_check_branch
      %219 = sbr.rel (0) target = $region17
    $region16: #{tpu_custom_call.1} parent=1 // pred_region
      %s221 = ssub.s32 256, 256
      %222 = vsyncadd [#allocation3], %s221
      %s223 = sshll.u32 [#allocation2], 4
      %s224 = int_to_ptr.vmem [resolvable:$true] %s223
      %229 = dma.vmem_to_hbm [thread:$0]  %s224, 256, %s3, [#allocation3], 128, 128, 8
    $region17: #{tpu_custom_call.1} parent=1 // pred_fallthru
      _
    // Predicated region
    $region18: #{tpu_custom_call.1} parent=1 // pred_check
      _
    $region19: #{tpu_custom_call.1} parent=1 // pred_check_branch
      %231 = sbr.rel (0) target = $region21
    $region20: #{tpu_custom_call.1} parent=1 // pred_region
      %232 = dma.done [#allocation3], 256
    $region21: #{tpu_custom_call.1} parent=1 // pred_fallthru
      _
    %233 = vsyncpa [#allocation3], 1

</llo_original>
